<compile_context>
chip_gen: v7x
topology: tpu7x:2x2x1
jax: 0.10.0
libtpu: 0.0.40
codegen_flags: <defaults>
</compile_context>

<pallas_src>
import jax
import jax.numpy as jnp
from jax import lax
from jax.experimental import pallas as pl
from jax.experimental.pallas import tpu as pltpu


_MXU_DTYPE = jnp.bfloat16      # MXU operands; accumulation stays f32


# ----------------------------------------------------------------------------
# Sizing helpers
# ----------------------------------------------------------------------------
def _vmem_budget_bytes():
    """~75% of this generation's VMEM (fallback: v7x's 64 MiB per-TC floor)."""
    try:
        cap = int(pltpu.get_tpu_info().vmem_capacity_bytes)
    except Exception:
        cap = 64 << 20
    return (cap * 3) // 4


def _pick_tile(dim, preferred, want_two_tiles=False):
    """Largest multiple-of-8 tile <= `preferred` that divides `dim`.
    Falls back to a full-extent block (always layout-legal) when `dim` has no
    such divisor.  With want_two_tiles, tries to leave >= 2 grid tiles so both
    v7x TensorCores get work on a 'parallel' axis."""
    def pick(pref):
        if dim % 8 != 0:
            return dim
        t = min((max(pref, 8) // 8) * 8, dim)
        while t >= 8:
            if dim % t == 0:
                return t
            t -= 8
        return dim

    t = pick(preferred)
    if want_two_tiles and dim // t < 2 and dim >= 16:
        t2 = pick(max(t // 2, 8))
        if dim // t2 >= 2:
            t = t2
    return t


def _vmem_limit(io_block_bytes, scratch_bytes, budget):
    # Double-buffered I/O blocks (conservative: invariant blocks counted too)
    # + scratch + margin, clamped to the generation-aware budget.
    need = 2 * io_block_bytes + scratch_bytes + (4 << 20)
    return int(min(max(need, 32 << 20), budget))


# ----------------------------------------------------------------------------
# Kernel 1: KG projection (computed once; hoisted out of per-batch-tile work)
#   kg_emb_tile = kg_tile @ Wk_t + bk     (Wk_t, bk pre-scaled by 1/temperature)
# ----------------------------------------------------------------------------
def _kg_proj_kernel(kg_ref, wk_ref, bk_ref, out_ref):
    acc = jnp.dot(kg_ref[...].astype(_MXU_DTYPE), wk_ref[...],
                  preferred_element_type=jnp.float32)
    out_ref[...] = (acc + bk_ref[...]).astype(out_ref.dtype)


# ----------------------------------------------------------------------------
# Kernel 2 (fused): streamed mean-pool over S + text projection + logits.
#   grid = (B tiles, S chunks); f32 sum accumulator in VMEM scratch.
#   On the last S chunk:
#     text_emb = sum_S @ Wt_t + bt   (Wt_t pre-scaled by 1/S)
#     logits   = text_emb . kg_emb   (kg_emb resident, temperature folded in)
# ----------------------------------------------------------------------------
def _fused_pool_proj_logits_kernel(text_ref, wt_ref, bt_ref, ke_ref,
                                   out_ref, acc_ref):
    s = pl.program_id(1)

    @pl.when(s == 0)
    def _():
        acc_ref[...] = jnp.zeros_like(acc_ref)

    # Sequence reduction in f32 (VPU); text stays in its native dtype in HBM.
    acc_ref[...] += jnp.sum(text_ref[...].astype(jnp.float32), axis=1)

    @pl.when(s == pl.num_programs(1) - 1)
    def _():
        emb = jnp.dot(acc_ref[...].astype(_MXU_DTYPE), wt_ref[...],
                      preferred_element_type=jnp.float32) + bt_ref[...]
        out_ref[...] = lax.dot_general(
            emb.astype(ke_ref.dtype), ke_ref[...],
            dimension_numbers=(((1,), (1,)), ((), ())),
            preferred_element_type=jnp.float32).astype(out_ref.dtype)


# ----------------------------------------------------------------------------
# Wrapper: weight prep (pre-transpose + fold 1/S and 1/T), 2 passes, no padding
# ----------------------------------------------------------------------------
def ontomed_head(text_features, kg_features, params, temperature):
    """Pallas-backed forward of the OntoMedKGTransformer head."""
    B, S, Dt = text_features.shape
    K, Dk = kg_features.shape
    P = params["w_text"].shape[0]

    budget = _vmem_budget_bytes()
    f32 = jnp.float32
    inv_t = f32(1.0 / temperature)

    # Weight prep (tiny, layout-only): pre-transpose to (in, out); fold 1/S
    # into W_t and 1/temperature into W_k / b_k. No scalar multiplies in-kernel.
    wt_t = (params["w_text"].astype(f32).T / f32(S)).astype(_MXU_DTYPE)
    bt = params["b_text"].astype(f32).reshape(1, P)
    wk_t = (params["w_kg"].astype(f32).T * inv_t).astype(_MXU_DTYPE)
    bk = (params["b_kg"].astype(f32) * inv_t).reshape(1, P)

    # ---- pass 1: kg_emb [K, P]  (computed once, not per batch tile) --------
    TK = _pick_tile(K, 256, want_two_tiles=True)
    kg_itemsize = kg_features.dtype.itemsize
    k1_io = TK * Dk * kg_itemsize + Dk * P * 2 + P * 4 + TK * P * 2
    kg_emb = pl.pallas_call(
        _kg_proj_kernel,
        out_shape=jax.ShapeDtypeStruct((K, P), _MXU_DTYPE),
        grid=(K // TK,),
        in_specs=[
            pl.BlockSpec((TK, Dk), lambda j: (j, 0)),
            pl.BlockSpec((Dk, P), lambda j: (0, 0)),
            pl.BlockSpec((1, P), lambda j: (0, 0)),
        ],
        out_specs=pl.BlockSpec((TK, P), lambda j: (j, 0)),
        compiler_params=pltpu.CompilerParams(
            dimension_semantics=("parallel",),
            vmem_limit_bytes=_vmem_limit(k1_io, 0, budget)),
        cost_estimate=pl.CostEstimate(
            flops=2 * K * Dk * P,
            transcendentals=0,
            bytes_accessed=K * Dk * kg_itemsize + Dk * P * 2 + K * P * 2),
    )(kg_features, wk_t, bk)

    # ---- pass 2 (fused): logits [B, K]  (S streamed; kg_emb resident) ------
    TB = _pick_tile(B, 128, want_two_tiles=True)
    text_itemsize = text_features.dtype.itemsize
    # Keep one text block <= ~budget/4 so it double-buffers comfortably
    # (shrinks TS automatically on v7x's smaller VMEM).
    row_bytes = max(TB * Dt * text_itemsize, 1)
    ts_pref = max(8, min(512, (budget // 4) // row_bytes))
    TS = _pick_tile(S, ts_pref)

    k2_io = (TB * TS * Dt * text_itemsize
             + Dt * P * 2 + P * 4 + K * P * 2 + TB * K * 4)
    k2_scratch = TB * Dt * 4
    logits = pl.pallas_call(
        _fused_pool_proj_logits_kernel,
        out_shape=jax.ShapeDtypeStruct((B, K), jnp.float32),
        grid=(B // TB, S // TS),
        in_specs=[
            pl.BlockSpec((TB, TS, Dt), lambda i, s: (i, s, 0)),
            pl.BlockSpec((Dt, P), lambda i, s: (0, 0)),
            pl.BlockSpec((1, P), lambda i, s: (0, 0)),
            pl.BlockSpec((K, P), lambda i, s: (0, 0)),
        ],
        out_specs=pl.BlockSpec((TB, K), lambda i, s: (i, 0)),
        scratch_shapes=[pltpu.VMEM((TB, Dt), jnp.float32)],
        compiler_params=pltpu.CompilerParams(
            dimension_semantics=("parallel", "arbitrary"),
            vmem_limit_bytes=_vmem_limit(k2_io, k2_scratch, budget)),
        cost_estimate=pl.CostEstimate(
            flops=B * S * Dt + 2 * B * Dt * P + 2 * B * P * K,
            transcendentals=0,
            bytes_accessed=(B * S * Dt * text_itemsize
                            + Dt * P * 2 + K * P * 2 + B * K * 4)),
    )(text_features, wt_t, bt, kg_emb)

    return logits


# ----------------------------------------------------------------------------
# Deterministic parameter init (xavier_uniform for projections, as _init_weights)
# ----------------------------------------------------------------------------
def xavier_uniform(key, shape):
    fan_out, fan_in = shape
    limit = (6.0 / (fan_in + fan_out)) ** 0.5
    return jax.random.uniform(key, shape, jnp.float32, -limit, limit)


def init_params(key, text_dim, kg_dim, proj_dim):
    k1, k2, k3, k4 = jax.random.split(key, 4)
    return {
        "w_text": xavier_uniform(k1, (proj_dim, text_dim)),
        "b_text": jax.random.uniform(k3, (proj_dim,), jnp.float32, -0.1, 0.1),
        "w_kg":   xavier_uniform(k2, (proj_dim, kg_dim)),
        "b_kg":   jax.random.uniform(k4, (proj_dim,), jnp.float32, -0.1, 0.1),
    }


# ----------------------------------------------------------------------------
# Pure-JAX f32 reference for correctness checking
# ----------------------------------------------------------------------------
def ontomed_head_ref(text_features, kg_features, params, temperature):
    pooled = jnp.mean(text_features.astype(jnp.float32), axis=1)
    text_emb = pooled @ params["w_text"].T + params["b_text"]
    kg_emb = kg_features.astype(jnp.float32) @ params["w_kg"].T + params["b_kg"]
    return (text_emb @ kg_emb.T) / temperature


if __name__ == "__main__":
    # Small config consistent with the module's forward
    B, S = 2, 8           # batch, sequence length
    text_dim = 32
    kg_dim = 32
    proj_dim = 32
    K = 4                 # number of KG entities in the batch
    temperature = 0.07

    key = jax.random.PRNGKey(0)
    k_text, k_kg, k_params = jax.random.split(key, 3)

    text_features = jax.random.normal(k_text, (B, S, text_dim), jnp.float32)
    kg_features = jax.random.normal(k_kg, (K, kg_dim), jnp.float32)
    params = init_params(k_params, text_dim, kg_dim, proj_dim)

    logits = ontomed_head(text_features, kg_features, params, temperature)
    logits = jax.block_until_ready(logits)
    assert logits.shape == (B, K), logits.shape

    ref = ontomed_head_ref(text_features, kg_features, params, temperature)
    # bf16 MXU operands with f32 accumulation: check relative-to-max error.
    rel_err = float(jnp.max(jnp.abs(logits - ref)) /
                    (jnp.max(jnp.abs(ref)) + 1e-6))
    assert rel_err < 2e-2, f"mismatch vs reference: rel_err={rel_err}"

    print("KERNEL_OK")
</pallas_src>

<mosaic_0001>
module attributes {stable_mosaic.version = 11 : i64} {
  func.func @_kg_proj_kernel(%arg0: i32, %arg1: memref<4x32xf32, #tpu.memory_space<vmem>>, %arg2: memref<32x32xbf16, #tpu.memory_space<vmem>>, %arg3: memref<1x32xf32, #tpu.memory_space<vmem>>, %arg4: memref<4x32xbf16, #tpu.memory_space<vmem>>) attributes {dimension_semantics = [#tpu.dimension_semantics<parallel>], iteration_bounds = array<i64: 1>, scalar_prefetch = 0 : i64, scratch_operands = 0 : i64, tpu.core_type = #tpu.core_type<tc>, window_params = [{transform_indices = @transform_0, window_bounds = array<i64: 4, 32>}, {pipeline_mode = #tpu.pipeline_mode<synchronous>, transform_indices = @transform_1, window_bounds = array<i64: 32, 32>}, {pipeline_mode = #tpu.pipeline_mode<synchronous>, transform_indices = @transform_2, window_bounds = array<i64: 1, 32>}, {transform_indices = @transform_3, window_bounds = array<i64: 4, 32>}]} {
    %c0 = arith.constant 0 : index
    %c0_0 = arith.constant 0 : index
    %0 = vector.load %arg1[%c0, %c0_0] : memref<4x32xf32, #tpu.memory_space<vmem>>, vector<4x32xf32>
    %1 = arith.truncf %0 : vector<4x32xf32> to vector<4x32xbf16>
    %c0_1 = arith.constant 0 : index
    %c0_2 = arith.constant 0 : index
    %2 = vector.load %arg2[%c0_1, %c0_2] : memref<32x32xbf16, #tpu.memory_space<vmem>>, vector<32x32xbf16>
    %cst = arith.constant dense<0.000000e+00> : vector<4x32xf32>
    %3 = tpu.matmul %1, %2, %cst {dimension_numbers = #tpu.dot_dimension_numbers<[1], [0], [0], [1], [0, 0, 1, 1], [], []>} : vector<4x32xbf16>, vector<32x32xbf16>, vector<4x32xf32> -> vector<4x32xf32>
    %c0_3 = arith.constant 0 : index
    %c0_4 = arith.constant 0 : index
    %4 = vector.load %arg3[%c0_3, %c0_4] : memref<1x32xf32, #tpu.memory_space<vmem>>, vector<1x32xf32>
    %5 = vector.broadcast %4 : vector<1x32xf32> to vector<4x32xf32>
    %6 = arith.addf %3, %5 : vector<4x32xf32>
    %7 = arith.truncf %6 : vector<4x32xf32> to vector<4x32xbf16>
    %c0_5 = arith.constant 0 : index
    %c0_6 = arith.constant 0 : index
    %8 = vector.load %arg4[%c0_5, %c0_6] : memref<4x32xbf16, #tpu.memory_space<vmem>>, vector<4x32xbf16>
    tpu.vector_store %arg4[%c0_5, %c0_6], %7 {strides = array<i32>} : memref<4x32xbf16, #tpu.memory_space<vmem>>, vector<4x32xbf16>,
    return
  }
  func.func @transform_0(%arg0: i32) -> (i32, i32) {
    %c0_i32 = arith.constant 0 : i32
    %c0_i32_0 = arith.constant 0 : i32
    return %arg0, %c0_i32 : i32, i32
  }
  func.func @transform_1(%arg0: i32) -> (i32, i32) {
    %c0_i32 = arith.constant 0 : i32
    %c0_i32_0 = arith.constant 0 : i32
    %c0_i32_1 = arith.constant 0 : i32
    return %c0_i32, %c0_i32_0 : i32, i32
  }
  func.func @transform_2(%arg0: i32) -> (i32, i32) {
    %c0_i32 = arith.constant 0 : i32
    %c0_i32_0 = arith.constant 0 : i32
    %c0_i32_1 = arith.constant 0 : i32
    return %c0_i32, %c0_i32_0 : i32, i32
  }
  func.func @transform_3(%arg0: i32) -> (i32, i32) {
    %c0_i32 = arith.constant 0 : i32
    %c0_i32_0 = arith.constant 0 : i32
    return %arg0, %c0_i32 : i32, i32
  }
}

</mosaic_0001>

<llo_original>
// kernel: tpu_custom_call.1
$region0: #{tpu_custom_call.1}
  #allocation0 [shape = 'u32[]', space=smem, size = 0x4, offset = 0x4, fixed_abs, tag = 'smem constant byte address 0x4 - core index']
  #allocation1 [shape = 'u32[144,128]{1,0:T(1,128)}', space=vmem, size = 0x12000, scoped, tag = 'internal scratch']
  %s0 = inlined_call_operand.hbm [shape: f32[4,32], index: 0, kind: input, shape index: {}]
  %s1 = inlined_call_operand.hbm [shape: bf16[32,32], index: 1, kind: input, shape index: {}]
  %s2 = inlined_call_operand.vmem [shape: f32[1,32], index: 2, kind: input, shape index: {}]
  %s3 = inlined_call_operand.hbm [shape: bf16[4,32], index: 3, kind: output, shape index: {}]
  %s4 = sld [smem:[#allocation0]]
  $region30: #{tpu_custom_call.1} parent=0
    _
  %s6 = ssub.s32 1, %s4
  %s7 = scalar_select 0, %s6, %s4
  $region1: #{tpu_custom_call.1} parent=0
    #allocation2 [shape = 'u8[2048]{0}', space=vmem, size = 0x800, scoped, tag = 'input window, operand 0, single buffered']
    #allocation3 [shape = 's32[1]{0}', space=sflag, size = 0x4, scoped, tag = 'scoped memory for tpu_custom_call.1']
    #allocation4 [shape = 's32[1]{0}', space=sflag, size = 0x4, scoped, tag = 'scoped memory for tpu_custom_call.1']
    #allocation5 [shape = 'u8[8192]{0}', space=vmem, size = 0x2000, scoped, tag = 'input window, operand 1, single buffered']
    #allocation6 [shape = 's32[1]{0}', space=sflag, size = 0x4, scoped, tag = 'scoped memory for tpu_custom_call.1']
    #allocation7 [shape = 'u8[1024]{0}', space=vmem, size = 0x400, scoped, tag = 'output window, operand 0, single buffered']
    %8 = vsyncpa [#allocation3], 0
    %9 = vsyncpa [#allocation6], 0
    %10 = vsyncpa [#allocation4], 0
    // Predicated region
    $region2: #{tpu_custom_call.1} parent=1 // pred_check
      _
    $region3: #{tpu_custom_call.1} parent=1 // pred_check_branch
      %12 = sbr.rel (0) target = $region5
    $region4: #{tpu_custom_call.1} parent=1 // pred_region
      %s14 = ssub.s32 64, 64
      %15 = vsyncadd [#allocation3], %s14
      %s17 = sshll.u32 [#allocation2], 4
      %s18 = int_to_ptr.vmem [resolvable:$true] %s17
      %20 = dma.hbm_to_vmem [thread:$0]  %s0, 64, %s18, [#allocation3]
    $region5: #{tpu_custom_call.1} parent=1 // pred_fallthru
      _
    // Predicated region
    $region6: #{tpu_custom_call.1} parent=1 // pred_check
      _
    $region7: #{tpu_custom_call.1} parent=1 // pred_check_branch
      %22 = sbr.rel (0) target = $region9
    $region8: #{tpu_custom_call.1} parent=1 // pred_region
      %s24 = ssub.s32 256, 256
      %25 = vsyncadd [#allocation6], %s24
      %s26 = sshll.u32 [#allocation5], 4
      %s27 = int_to_ptr.vmem [resolvable:$true] %s26
      %32 = dma.hbm_to_vmem [thread:$0]  %s1, 256, %s27, [#allocation6], 64, 64, 4
    $region9: #{tpu_custom_call.1} parent=1 // pred_fallthru
      _
    // Predicated region
    $region10: #{tpu_custom_call.1} parent=1 // pred_check
      _
    $region11: #{tpu_custom_call.1} parent=1 // pred_check_branch
      %34 = sbr.rel (0) target = $region13
    $region12: #{tpu_custom_call.1} parent=1 // pred_region
      _
    $region13: #{tpu_custom_call.1} parent=1 // pred_fallthru
      _
    // Predicated region
    $region14: #{tpu_custom_call.1} parent=1 // pred_check
      _
    $region15: #{tpu_custom_call.1} parent=1 // pred_check_branch
      %36 = sbr.rel (0) target = $region17
    $region16: #{tpu_custom_call.1} parent=1 // pred_region
      %37 = dma.done [#allocation3], 64
    $region17: #{tpu_custom_call.1} parent=1 // pred_fallthru
      _
    // Predicated region
    $region18: #{tpu_custom_call.1} parent=1 // pred_check
      _
    $region19: #{tpu_custom_call.1} parent=1 // pred_check_branch
      %39 = sbr.rel (0) target = $region21
    $region20: #{tpu_custom_call.1} parent=1 // pred_region
      %40 = dma.done [#allocation6], 256
    $region21: #{tpu_custom_call.1} parent=1 // pred_fallthru
      _
    %v42 = vld [vmem:[#allocation2] sm:$0xf]
    %v43 = vpack.c.bf16 %v42, %v42
    %v44 = vld [vmem:[#allocation5] sm:$0xf]
    %v45 = vld [vmem:[#allocation5 + $0x4] sm:$0xf]
    %v46 = vld [vmem:[#allocation5 + $0x8] sm:$0xf]
    %v47 = vld [vmem:[#allocation5 + $0xc] sm:$0xf]
    %v48 = vld [vmem:[%s2] sm:$0x1]
    %v50 = vlaneseq
    %v51 = vshrl.u32 %v50, 7
    %v52 = vsub.s32 0, %v51
    %v53 = vrot.slane %v48, %v52
    %v59 = vunpack.c.l.b16 %v44
    %v60 = vunpack.c.l.b16 %v45
    %v61 = vunpack.c.l.b16 %v46
    %v62 = vunpack.c.l.b16 %v47
    %v63 = vpack.c.b16 %v60, %v59
    %v64 = vpack.c.b16 %v62, %v61
    %vm67 = vcmask 261120
    %v69 = vsel %vm67, %v43, 0
    %71 = vmatprep.subr.bf16.mxu0 0
    %72 = vmatpush1.bf16.msra.mxu0 %v63
    %73 = vmatprep.subr.bf16.mxu0 0
    %74 = vmatpush1.bf16.msra.mxu0 %v64
    %75 = vmatprep.subr.bf16.mxu0 0
    %76 = vmatpush1.bf16.msra.mxu0 0
    %77 = vmatprep.subr.bf16.mxu0 0
    %78 = vmatpush1.bf16.msra.mxu0 0
    %79 = vmatprep.subr.bf16.mxu0 0
    %80 = vmatpush1.bf16.msra.mxu0 0
    %81 = vmatprep.subr.bf16.mxu0 0
    %82 = vmatpush1.bf16.msra.mxu0 0
    %83 = vmatprep.subr.bf16.mxu0 0
    %84 = vmatpush1.bf16.msra.mxu0 0
    %85 = vmatprep.subr.bf16.mxu0 0
    %86 = vmatpush1.bf16.msra.mxu0 0
    %87 = vmatprep.subr.bf16.mxu0 0
    %88 = vmatpush1.bf16.msra.mxu0 0
    %89 = vmatprep.subr.bf16.mxu0 0
    %90 = vmatpush1.bf16.msra.mxu0 0
    %91 = vmatprep.subr.bf16.mxu0 0
    %92 = vmatpush1.bf16.msra.mxu0 0
    %93 = vmatprep.subr.bf16.mxu0 0
    %94 = vmatpush1.bf16.msra.mxu0 0
    %95 = vmatprep.subr.bf16.mxu0 0
    %96 = vmatpush1.bf16.msra.mxu0 0
    %97 = vmatprep.subr.bf16.mxu0 0
    %98 = vmatpush1.bf16.msra.mxu0 0
    %99 = vmatprep.subr.bf16.mxu0 0
    %100 = vmatpush1.bf16.msra.mxu0 0
    %101 = vmatprep.subr.bf16.mxu0 0
    %102 = vmatpush1.bf16.msra.mxu0 0
    %103 = vmatprep.mubr.bf16.mxu0 0
    %104 = vmatmul.mubr.bf16.gmra.mrb[0].mxu0 %v69
    %v105 = vpop.f32.mrb[0].mxu0
    %v106 = vadd.f32 %v53, %v105
    %v107 = vpop.f32.mrb[0].mxu0
    %v108 = vpop.f32.mrb[0].mxu0
    %v109 = vpop.f32.mrb[0].mxu0
    %110 = vdwg.mxu0
    %v111 = vpack.c.bf16 %v106, %v106
    %vm112 = vcmask 254976
    %113 = vst.msk [vmem:[#allocation7] sm:$0x3] %vm112, %v111
    // Predicated region
    $region22: #{tpu_custom_call.1} parent=1 // pred_check
      _
    $region23: #{tpu_custom_call.1} parent=1 // pred_check_branch
      %115 = sbr.rel (0) target = $region25
    $region24: #{tpu_custom_call.1} parent=1 // pred_region
      %s117 = ssub.s32 32, 32
      %118 = vsyncadd [#allocation4], %s117
      %s120 = sshll.u32 [#allocation7], 4
      %s121 = int_to_ptr.vmem [resolvable:$true] %s120
      %123 = dma.vmem_to_hbm [thread:$0]  %s121, 32, %s3, [#allocation4]
    $region25: #{tpu_custom_call.1} parent=1 // pred_fallthru
      _
    // Predicated region
    $region26: #{tpu_custom_call.1} parent=1 // pred_check
      _
    $region27: #{tpu_custom_call.1} parent=1 // pred_check_branch
      %125 = sbr.rel (0) target = $region29
    $region28: #{tpu_custom_call.1} parent=1 // pred_region
      %126 = dma.done [#allocation4], 32
    $region29: #{tpu_custom_call.1} parent=1 // pred_fallthru
      _
    %127 = vsyncpa [#allocation3], 1
    %128 = vsyncpa [#allocation6], 1
    %129 = vsyncpa [#allocation4], 1

</llo_original>
